<compile_context>
chip_gen: v7x
topology: tpu7x:2x2x1
jax: 0.10.0
libtpu: 0.0.40
codegen_flags: <defaults>
</compile_context>

<pallas_src>
import functools

import jax
import jax.numpy as jnp
from jax.experimental import pallas as pl
from jax.experimental.pallas import tpu as pltpu


# ----------------------------------------------------------------------------
# Generation-aware VMEM budgets (v5e/v6e: 128 MiB physical, v7x: 64 MiB).
# ----------------------------------------------------------------------------
def _vmem_capacity_bytes():
    try:
        cap = getattr(pltpu.get_tpu_info(), "vmem_capacity_bytes", None)
        if cap:
            return int(cap)
    except Exception:
        pass
    return 64 * 1024 * 1024  # conservative fallback (v7x-sized)


_VMEM_CAPACITY = _vmem_capacity_bytes()
_VMEM_LIMIT = (_VMEM_CAPACITY * 3) // 4       # scoped limit handed to Mosaic
_ATTN_TILE_BUDGET = _VMEM_LIMIT // 3          # conservative (rough temp accounting)
_FINAL_TILE_BUDGET = (_VMEM_LIMIT * 7) // 10


# ----------------------------------------------------------------------------
# Tile-size helpers (all trace-time Python on static shapes).
# ----------------------------------------------------------------------------
def _divisors(n):
    return [i for i in range(1, n + 1) if n % i == 0]


def _divisor_tiles(dim, align):
    """Divisors of `dim` that are legal (8,128)-rule block extents: multiples
    of `align`, or the full extent."""
    return [t for t in _divisors(dim) if t % align == 0 or t == dim]


def _pick_tile(dim, preferred, align):
    """Largest power-of-two tile <= preferred dividing dim and >= align,
    else the full extent (always legal)."""
    t = preferred
    while t >= align:
        if dim % t == 0:
            return t
        t //= 2
    return dim


def _choose_attn_tiles(BH, Lq, Lk, d, attn_itemsize, budget):
    """Pick (Hb, tq) for the attention grid: prefer >=2 grid steps (v7x
    megacore + pipelining), then the largest per-step tile under budget."""
    tq_cands = _divisor_tiles(Lq, 8)
    hb_cands = _divisors(BH)

    def per_step_bytes(Hb, tq):
        io = (Hb * tq * d * 4                  # q in (f32)
              + 2 * Hb * Lk * d * 4            # k, v in (resident across q tiles)
              + Hb * tq * d * 4                # ctx out
              + Hb * tq * Lk * attn_itemsize)  # attention out
        tmp = 3 * Hb * tq * Lk * 4             # scores / exp / prob temporaries
        return 2 * io + tmp                    # double-buffered pipeline blocks

    best_key, best = None, (1, tq_cands[0])    # fallback: smallest legal tiles
    for tq in tq_cands:
        for Hb in hb_cands:
            if per_step_bytes(Hb, tq) > budget:
                continue
            steps = (BH // Hb) * (Lq // tq)
            key = (min(steps, 2), Hb * tq)
            if best_key is None or key > best_key:
                best_key, best = key, (Hb, tq)
    return best


def _choose_final_tiles(N, D, budget):
    """Pick (tm, tk) for the K-tiled final linear+LayerNorm kernel."""
    tms = _divisor_tiles(N, 8)
    tks = _divisor_tiles(D, 128)

    def est(tm, tk):
        return (2 * tm * tk * 4     # context tile (f32, double-buffered)
                + 2 * tk * D * 2    # bf16 weight tile (double-buffered)
                + 2 * tm * D * 4    # residual tile
                + 2 * tm * D * 4    # output tile
                + tm * D * 4        # f32 accumulator
                + 8 * D * 4)        # bias / gamma / beta

    tm = max([t for t in tms if t <= 256] or [tms[0]])
    tk = max([t for t in tks if t <= 512] or [tks[0]])
    while est(tm, tk) > budget:
        smaller_tm = [t for t in tms if t < tm]
        smaller_tk = [t for t in tks if t < tk]
        if smaller_tm and 5 * tm * 4 >= 2 * tk * 2:   # row-resident bytes dominate
            tm = smaller_tm[-1]
        elif smaller_tk:
            tk = smaller_tk[-1]
        elif smaller_tm:
            tm = smaller_tm[-1]
        else:
            break
    return tm, tk


# ----------------------------------------------------------------------------
# Kernel 1: tiled  y = x @ W + b   (W in [in, out] layout, bf16 weight,
# f32 VMEM accumulator, reduction axis last).
# ----------------------------------------------------------------------------
def _matmul_bias_kernel(x_ref, w_ref, b_ref, o_ref, acc_ref):
    @pl.when(pl.program_id(2) == 0)
    def _init():
        acc_ref[...] = jnp.zeros_like(acc_ref)

    acc_ref[...] += jnp.dot(
        x_ref[...].astype(jnp.bfloat16), w_ref[...],
        preferred_element_type=jnp.float32)

    @pl.when(pl.program_id(2) == pl.num_programs(2) - 1)
    def _finalize():
        o_ref[...] = acc_ref[...] + b_ref[...]


def linear(x2d, w_in_out, bias, *, tm=256, tn=256, tk=256):
    """x2d: [M, K] f32, w_in_out: [K, N] (bf16), bias: [N] f32 -> [M, N] f32."""
    M, K = x2d.shape
    N = w_in_out.shape[1]
    tm = _pick_tile(M, tm, 8)
    tk = _pick_tile(K, tk, 128)
    tn = _pick_tile(N, tn, 128)
    grid = (M // tm, N // tn, K // tk)
    cost = pl.CostEstimate(
        flops=2 * M * K * N,
        transcendentals=0,
        bytes_accessed=4 * (M * K + N + M * N) + K * N * w_in_out.dtype.itemsize)
    return pl.pallas_call(
        _matmul_bias_kernel,
        out_shape=jax.ShapeDtypeStruct((M, N), jnp.float32),
        grid_spec=pltpu.PrefetchScalarGridSpec(
            num_scalar_prefetch=0,
            grid=grid,
            in_specs=[
                pl.BlockSpec((tm, tk), lambda i, j, k: (i, k)),
                pl.BlockSpec((tk, tn), lambda i, j, k: (k, j)),
                pl.BlockSpec((1, tn), lambda i, j, k: (0, j)),
            ],
            out_specs=pl.BlockSpec((tm, tn), lambda i, j, k: (i, j)),
            scratch_shapes=[pltpu.VMEM((tm, tn), jnp.float32)],
        ),
        compiler_params=pltpu.CompilerParams(
            dimension_semantics=("parallel", "parallel", "arbitrary"),
            vmem_limit_bytes=_VMEM_LIMIT),
        cost_estimate=cost,
    )(x2d, w_in_out, bias.reshape(1, N))


# ----------------------------------------------------------------------------
# Kernel 2: scaled dot-product attention, q-tiled, a block of (batch*head)
# slices per grid step.  Scale folded into q; softmax over the full key axis
# (exact divide, matches torch.nn.Softmax(dim=2)).
# ----------------------------------------------------------------------------
def _attn_kernel(q_ref, k_ref, v_ref, ctx_ref, attn_ref, *, scale):
    q = (q_ref[...] * scale).astype(jnp.bfloat16)    # (Hb, tq, d)
    k = k_ref[...].astype(jnp.bfloat16)              # (Hb, Lk, d)
    v = v_ref[...].astype(jnp.bfloat16)              # (Hb, Lk, d)
    s = jnp.einsum('hqd,hkd->hqk', q, k, preferred_element_type=jnp.float32)
    m = jnp.max(s, axis=-1, keepdims=True)
    e = jnp.exp(s - m)
    p = e / jnp.sum(e, axis=-1, keepdims=True)       # exact softmax (parity)
    attn_ref[...] = p.astype(attn_ref.dtype)
    ctx_ref[...] = jnp.einsum('hqk,hkd->hqd', p.astype(jnp.bfloat16), v,
                              preferred_element_type=jnp.float32)
    # TODO(synk): when dim_per_head < 128, pack rows/heads along the lane axis
    # for the ctx store and q/k/v loads to avoid masked vst.msk partial stores
    # (biggest on v5e's single store slot).


def scaled_dot_product_attention(q, k, v, scale, *, attn_dtype=jnp.float32):
    """q: [BH, Lq, d], k/v: [BH, Lk, d] -> (context [BH, Lq, d],
    attention [BH, Lq, Lk])."""
    BH, Lq, d = q.shape
    Lk = k.shape[1]
    attn_itemsize = jnp.dtype(attn_dtype).itemsize
    Hb, tq = _choose_attn_tiles(BH, Lq, Lk, d, attn_itemsize, _ATTN_TILE_BUDGET)
    kernel = functools.partial(_attn_kernel, scale=scale)
    cost = pl.CostEstimate(
        flops=4 * BH * Lq * Lk * d,
        transcendentals=BH * Lq * (Lk + 1),
        bytes_accessed=4 * (2 * BH * Lq * d + 2 * BH * Lk * d)
                       + attn_itemsize * BH * Lq * Lk)
    return pl.pallas_call(
        kernel,
        out_shape=(
            jax.ShapeDtypeStruct((BH, Lq, d), jnp.float32),
            jax.ShapeDtypeStruct((BH, Lq, Lk), attn_dtype),
        ),
        grid_spec=pltpu.PrefetchScalarGridSpec(
            num_scalar_prefetch=0,
            grid=(BH // Hb, Lq // tq),
            in_specs=[
                pl.BlockSpec((Hb, tq, d), lambda i, j: (i, j, 0)),
                pl.BlockSpec((Hb, Lk, d), lambda i, j: (i, 0, 0)),  # K resident over q tiles
                pl.BlockSpec((Hb, Lk, d), lambda i, j: (i, 0, 0)),  # V resident over q tiles
            ],
            out_specs=(
                pl.BlockSpec((Hb, tq, d), lambda i, j: (i, j, 0)),
                pl.BlockSpec((Hb, tq, Lk), lambda i, j: (i, j, 0)),
            ),
        ),
        compiler_params=pltpu.CompilerParams(
            dimension_semantics=("parallel", "parallel"),
            vmem_limit_bytes=_VMEM_LIMIT),
        cost_estimate=cost,
    )(q, k, v)


# ----------------------------------------------------------------------------
# Kernel 3: fused final linear (K-tiled, bf16 weight, f32 accumulator) +
# residual add + LayerNorm at the last reduction step.
# ----------------------------------------------------------------------------
def _final_kernel(c_ref, w_ref, b_ref, r_ref, g_ref, beta_ref, o_ref, acc_ref):
    @pl.when(pl.program_id(1) == 0)
    def _init():
        acc_ref[...] = jnp.zeros_like(acc_ref)

    acc_ref[...] += jnp.dot(
        c_ref[...].astype(jnp.bfloat16), w_ref[...],
        preferred_element_type=jnp.float32)

    @pl.when(pl.program_id(1) == pl.num_programs(1) - 1)
    def _finalize():
        x = r_ref[...] + acc_ref[...] + b_ref[...]   # residual + Wx + b (dropout p=0.0)
        mu = jnp.mean(x, axis=-1, keepdims=True)
        var = jnp.mean(jnp.square(x - mu), axis=-1, keepdims=True)
        xn = (x - mu) * jax.lax.rsqrt(var + 1e-5)
        o_ref[...] = xn * g_ref[...] + beta_ref[...]


def final_linear_residual_layernorm(ctx2d, w_bf16, bias, resid2d, gamma, beta):
    N, D = ctx2d.shape
    tm, tk = _choose_final_tiles(N, D, _FINAL_TILE_BUDGET)
    cost = pl.CostEstimate(
        flops=2 * N * D * D + 10 * N * D,
        transcendentals=N,
        bytes_accessed=4 * (3 * N * D + 3 * D) + 2 * D * D)
    return pl.pallas_call(
        _final_kernel,
        out_shape=jax.ShapeDtypeStruct((N, D), jnp.float32),
        grid_spec=pltpu.PrefetchScalarGridSpec(
            num_scalar_prefetch=0,
            grid=(N // tm, D // tk),
            in_specs=[
                pl.BlockSpec((tm, tk), lambda i, k: (i, k)),   # context
                pl.BlockSpec((tk, D), lambda i, k: (k, 0)),    # bf16 weight, K-tiled
                pl.BlockSpec((1, D), lambda i, k: (0, 0)),     # bias
                pl.BlockSpec((tm, D), lambda i, k: (i, 0)),    # residual
                pl.BlockSpec((1, D), lambda i, k: (0, 0)),     # LN gamma
                pl.BlockSpec((1, D), lambda i, k: (0, 0)),     # LN beta
            ],
            out_specs=pl.BlockSpec((tm, D), lambda i, k: (i, 0)),
            scratch_shapes=[pltpu.VMEM((tm, D), jnp.float32)],
        ),
        compiler_params=pltpu.CompilerParams(
            dimension_semantics=("parallel", "arbitrary"),
            vmem_limit_bytes=_VMEM_LIMIT),
        cost_estimate=cost,
    )(ctx2d, w_bf16, bias.reshape(1, D), resid2d,
      gamma.reshape(1, D), beta.reshape(1, D))


# ----------------------------------------------------------------------------
# Parameter prep: one-time bf16 weight casts and hoisted fused-QKV concat.
# ----------------------------------------------------------------------------
def prepare_params(params):
    p = dict(params)
    for name in ("wq", "wk", "wv", "wf"):
        p[name + "_bf16"] = params[name].astype(jnp.bfloat16)
    p["wqkv_bf16"] = jnp.concatenate(
        [p["wq_bf16"], p["wk_bf16"], p["wv_bf16"]], axis=1)
    p["bqkv"] = jnp.concatenate(
        [params["bq"], params["bk"], params["bv"]], axis=0)
    return p


def init_params(rng, model_dim):
    keys = jax.random.split(rng, 8)
    s = 0.05
    # weights stored pre-transposed as [in, out] so kernels compute x @ W
    return {
        "wk": s * jax.random.normal(keys[0], (model_dim, model_dim), jnp.float32),
        "bk": s * jax.random.normal(keys[1], (model_dim,), jnp.float32),
        "wv": s * jax.random.normal(keys[2], (model_dim, model_dim), jnp.float32),
        "bv": s * jax.random.normal(keys[3], (model_dim,), jnp.float32),
        "wq": s * jax.random.normal(keys[4], (model_dim, model_dim), jnp.float32),
        "bq": s * jax.random.normal(keys[5], (model_dim,), jnp.float32),
        "wf": s * jax.random.normal(keys[6], (model_dim, model_dim), jnp.float32),
        "bf": s * jax.random.normal(keys[7], (model_dim,), jnp.float32),
        "ln_g": jnp.ones((model_dim,), jnp.float32),   # LayerNorm default init
        "ln_b": jnp.zeros((model_dim,), jnp.float32),
    }


# ----------------------------------------------------------------------------
# MultiHeadAttention forward (glue in plain JAX, hot paths in Pallas).
# ----------------------------------------------------------------------------
def multi_head_attention(params, key, value, query, num_heads, *,
                         attn_dtype=jnp.float32):
    """key/value/query: [B, L, model_dim] ->
       (output [B, L, model_dim], attention [B*num_heads, L, L])."""
    B, L, D = query.shape
    dim_per_head = D // num_heads
    if "wqkv_bf16" not in params:        # prefer calling prepare_params() once
        params = prepare_params(params)

    residual = query
    query2d = query.reshape(B * L, D)

    if key is value and value is query:
        # Self-attention: single fused [D, 3D] projection (one pipeline fill,
        # activation read from HBM once); weights/bias pre-fused in params.
        qkv = linear(query2d, params["wqkv_bf16"], params["bqkv"])
        query_p, key_p, value_p = qkv[:, :D], qkv[:, D:2 * D], qkv[:, 2 * D:]
    else:
        key_p = linear(key.reshape(-1, key.shape[-1]), params["wk_bf16"], params["bk"])
        value_p = linear(value.reshape(-1, value.shape[-1]), params["wv_bf16"], params["bv"])
        query_p = linear(query2d, params["wq_bf16"], params["bq"])

    # Reproduce the raw PyTorch .view(B*H, -1, d) exactly (contiguous
    # reinterpretation, not a head transpose).
    key_h = key_p.reshape(B * num_heads, -1, dim_per_head)
    value_h = value_p.reshape(B * num_heads, -1, dim_per_head)
    query_h = query_p.reshape(B * num_heads, -1, dim_per_head)

    # scale = (key.size(-1) // num_heads) ** (-0.5), verbatim integer division.
    scale_base = dim_per_head // num_heads
    assert scale_base > 0, (
        "reference scale (dim_per_head // num_heads) ** -0.5 requires "
        "dim_per_head >= num_heads")
    scale = float(scale_base) ** (-0.5)

    context, attention = scaled_dot_product_attention(
        query_h, key_h, value_h, scale, attn_dtype=attn_dtype)

    # context.view(B, -1, H*d) then flatten for linear_final: both are
    # contiguous reinterpretations, so one reshape is exact.
    context2d = context.reshape(B * L, D)

    output2d = final_linear_residual_layernorm(
        context2d, params["wf_bf16"], params["bf"],
        residual.reshape(B * L, D), params["ln_g"], params["ln_b"])

    return output2d.reshape(B, L, D), attention


# ----------------------------------------------------------------------------
# Demo / smoke test.
# ----------------------------------------------------------------------------
if __name__ == "__main__":
    def _check(out, attn, B, L, D, H):
        out = jax.block_until_ready(out)
        attn = jax.block_until_ready(attn)
        assert out.shape == (B, L, D)
        assert attn.shape == (B * H, L, L)
        assert not bool(jnp.any(jnp.isnan(out)))
        assert not bool(jnp.any(jnp.isnan(attn)))

    base_rng = jax.random.PRNGKey(0)

    # --- Case A: B=2, L=8, model_dim=32, heads=4 (dim_per_head=8) ------------
    B, L, model_dim, num_heads = 2, 8, 32, 4
    rng = jax.random.fold_in(base_rng, 0)
    kp, kk, kv, kq = jax.random.split(rng, 4)
    params = prepare_params(init_params(kp, model_dim))
    key_in = jax.random.normal(kk, (B, L, model_dim), jnp.float32)
    value_in = jax.random.normal(kv, (B, L, model_dim), jnp.float32)
    query_in = jax.random.normal(kq, (B, L, model_dim), jnp.float32)

    # Cross-attention path (three separate tiled projections).
    out, attn = multi_head_attention(params, key_in, value_in, query_in, num_heads)
    _check(out, attn, B, L, model_dim, num_heads)

    # Self-attention path (fused [D, 3D] QKV projection).
    out_sa, attn_sa = multi_head_attention(params, query_in, query_in, query_in, num_heads)
    _check(out_sa, attn_sa, B, L, model_dim, num_heads)

    # --- Case B: B=2, L=32, model_dim=64, heads=4 (exercises q-tiled grid) ---
    B2, L2, model_dim2, num_heads2 = 2, 32, 64, 4
    rng2 = jax.random.fold_in(base_rng, 1)
    kp2, kq2 = jax.random.split(rng2, 2)
    params2 = prepare_params(init_params(kp2, model_dim2))
    query_in2 = jax.random.normal(kq2, (B2, L2, model_dim2), jnp.float32)

    out2, attn2 = multi_head_attention(params2, query_in2, query_in2, query_in2, num_heads2)
    _check(out2, attn2, B2, L2, model_dim2, num_heads2)

    print("KERNEL_OK")
</pallas_src>

<mosaic_0001>
module attributes {stable_mosaic.version = 11 : i64} {
  func.func @_matmul_bias_kernel(%arg0: i32, %arg1: i32, %arg2: i32, %arg3: memref<16x32xf32, #tpu.memory_space<vmem>>, %arg4: memref<32x32xbf16, #tpu.memory_space<vmem>>, %arg5: memref<1x32xf32, #tpu.memory_space<vmem>>, %arg6: memref<16x32xf32, #tpu.memory_space<vmem>>, %arg7: memref<16x32xf32, #tpu.memory_space<vmem>>) attributes {dimension_semantics = [#tpu.dimension_semantics<parallel>, #tpu.dimension_semantics<parallel>, #tpu.dimension_semantics<arbitrary>], iteration_bounds = array<i64: 1, 1, 1>, scalar_prefetch = 0 : i64, scratch_operands = 1 : i64, tpu.core_type = #tpu.core_type<tc>, window_params = [{transform_indices = @transform_0, window_bounds = array<i64: 16, 32>}, {transform_indices = @transform_1, window_bounds = array<i64: 32, 32>}, {transform_indices = @transform_2, window_bounds = array<i64: 1, 32>}, {transform_indices = @transform_3, window_bounds = array<i64: 16, 32>}]} {
    %c0_i32 = arith.constant 0 : i32
    %0 = arith.cmpi eq, %arg2, %c0_i32 : i32
    %1 = arith.extui %0 : i1 to i32
    %c0_i32_0 = arith.constant 0 : i32
    %2 = arith.cmpi ne, %1, %c0_i32_0 : i32
    scf.if %2 {
      %cst_10 = arith.constant 0.000000e+00 : f32
      %13 = vector.broadcast %cst_10 : f32 to vector<16x32xf32>
      %c0_11 = arith.constant 0 : index
      %c0_12 = arith.constant 0 : index
      %14 = vector.load %arg7[%c0_11, %c0_12] : memref<16x32xf32, #tpu.memory_space<vmem>>, vector<16x32xf32>
      tpu.vector_store %arg7[%c0_11, %c0_12], %13 {strides = array<i32>} : memref<16x32xf32, #tpu.memory_space<vmem>>, vector<16x32xf32>,
    } else {
    }
    %c0 = arith.constant 0 : index
    %c0_1 = arith.constant 0 : index
    %3 = vector.load %arg7[%c0, %c0_1] : memref<16x32xf32, #tpu.memory_space<vmem>>, vector<16x32xf32>
    %c0_2 = arith.constant 0 : index
    %c0_3 = arith.constant 0 : index
    %4 = vector.load %arg3[%c0_2, %c0_3] : memref<16x32xf32, #tpu.memory_space<vmem>>, vector<16x32xf32>
    %5 = arith.truncf %4 : vector<16x32xf32> to vector<16x32xbf16>
    %c0_4 = arith.constant 0 : index
    %c0_5 = arith.constant 0 : index
    %6 = vector.load %arg4[%c0_4, %c0_5] : memref<32x32xbf16, #tpu.memory_space<vmem>>, vector<32x32xbf16>
    %cst = arith.constant dense<0.000000e+00> : vector<16x32xf32>
    %7 = tpu.matmul %5, %6, %cst {dimension_numbers = #tpu.dot_dimension_numbers<[1], [0], [0], [1], [0, 0, 1, 1], [], []>} : vector<16x32xbf16>, vector<32x32xbf16>, vector<16x32xf32> -> vector<16x32xf32>
    %8 = arith.addf %3, %7 : vector<16x32xf32>
    %c0_6 = arith.constant 0 : index
    %c0_7 = arith.constant 0 : index
    %9 = vector.load %arg7[%c0_6, %c0_7] : memref<16x32xf32, #tpu.memory_space<vmem>>, vector<16x32xf32>
    tpu.vector_store %arg7[%c0_6, %c0_7], %8 {strides = array<i32>} : memref<16x32xf32, #tpu.memory_space<vmem>>, vector<16x32xf32>,
    %c0_i32_8 = arith.constant 0 : i32
    %10 = arith.cmpi eq, %arg2, %c0_i32_8 : i32
    %11 = arith.extui %10 : i1 to i32
    %c0_i32_9 = arith.constant 0 : i32
    %12 = arith.cmpi ne, %11, %c0_i32_9 : i32
    scf.if %12 {
      %c0_10 = arith.constant 0 : index
      %c0_11 = arith.constant 0 : index
      %13 = vector.load %arg7[%c0_10, %c0_11] : memref<16x32xf32, #tpu.memory_space<vmem>>, vector<16x32xf32>
      %c0_12 = arith.constant 0 : index
      %c0_13 = arith.constant 0 : index
      %14 = vector.load %arg5[%c0_12, %c0_13] : memref<1x32xf32, #tpu.memory_space<vmem>>, vector<1x32xf32>
      %15 = vector.broadcast %14 : vector<1x32xf32> to vector<16x32xf32>
      %16 = arith.addf %13, %15 : vector<16x32xf32>
      %c0_14 = arith.constant 0 : index
      %c0_15 = arith.constant 0 : index
      %17 = vector.load %arg6[%c0_14, %c0_15] : memref<16x32xf32, #tpu.memory_space<vmem>>, vector<16x32xf32>
      tpu.vector_store %arg6[%c0_14, %c0_15], %16 {strides = array<i32>} : memref<16x32xf32, #tpu.memory_space<vmem>>, vector<16x32xf32>,
    } else {
    }
    return
  }
  func.func @transform_0(%arg0: i32, %arg1: i32, %arg2: i32) -> (i32, i32) {
    %c0_i32 = arith.constant 0 : i32
    return %arg0, %arg2 : i32, i32
  }
  func.func @transform_1(%arg0: i32, %arg1: i32, %arg2: i32) -> (i32, i32) {
    %c0_i32 = arith.constant 0 : i32
    return %arg2, %arg1 : i32, i32
  }
  func.func @transform_2(%arg0: i32, %arg1: i32, %arg2: i32) -> (i32, i32) {
    %c0_i32 = arith.constant 0 : i32
    %c0_i32_0 = arith.constant 0 : i32
    return %c0_i32, %arg1 : i32, i32
  }
  func.func @transform_3(%arg0: i32, %arg1: i32, %arg2: i32) -> (i32, i32) {
    %c0_i32 = arith.constant 0 : i32
    return %arg0, %arg1 : i32, i32
  }
}

</mosaic_0001>

<llo_original>
// kernel: tpu_custom_call.1
$region0: #{tpu_custom_call.1}
  #allocation0 [shape = 'u32[]', space=smem, size = 0x4, offset = 0x4, fixed_abs, tag = 'smem constant byte address 0x4 - core index']
  #allocation1 [shape = 'u32[144,128]{1,0:T(1,128)}', space=vmem, size = 0x12000, scoped, tag = 'internal scratch']
  #allocation2 [shape = 'f32[16,32]{1,0:T(8,128)}', space=vmem, size = 0x2000, scoped, tag = 'scratch operand']
  %s0 = inlined_call_operand.hbm [shape: f32[16,32], index: 0, kind: input, shape index: {}]
  %s1 = inlined_call_operand.hbm [shape: bf16[32,32], index: 1, kind: input, shape index: {}]
  %s2 = inlined_call_operand.vmem [shape: f32[1,32], index: 2, kind: input, shape index: {}]
  %s3 = inlined_call_operand.hbm [shape: f32[16,32], index: 3, kind: output, shape index: {}]
  %s4 = sld [smem:[#allocation0]]
  $region38: #{tpu_custom_call.1} parent=0
    _
  %s6 = ssub.s32 1, %s4
  %s7 = scalar_select 0, %s6, %s4
  $region1: #{tpu_custom_call.1} parent=0
    #allocation3 [shape = 'u8[8192]{0}', space=vmem, size = 0x2000, scoped, tag = 'input window, operand 0, single buffered']
    #allocation4 [shape = 's32[1]{0}', space=sflag, size = 0x4, scoped, tag = 'scoped memory for tpu_custom_call.1']
    #allocation5 [shape = 's32[1]{0}', space=sflag, size = 0x4, scoped, tag = 'scoped memory for tpu_custom_call.1']
    #allocation6 [shape = 'u8[8192]{0}', space=vmem, size = 0x2000, scoped, tag = 'input window, operand 1, single buffered']
    #allocation7 [shape = 's32[1]{0}', space=sflag, size = 0x4, scoped, tag = 'scoped memory for tpu_custom_call.1']
    #allocation8 [shape = 'u8[8192]{0}', space=vmem, size = 0x2000, scoped, tag = 'output window, operand 0, single buffered']
    %8 = vsyncpa [#allocation4], 0
    %9 = vsyncpa [#allocation7], 0
    %10 = vsyncpa [#allocation5], 0
    // Predicated region
    $region2: #{tpu_custom_call.1} parent=1 // pred_check
      _
    $region3: #{tpu_custom_call.1} parent=1 // pred_check_branch
      %12 = sbr.rel (0) target = $region5
    $region4: #{tpu_custom_call.1} parent=1 // pred_region
      %s14 = ssub.s32 256, 256
      %15 = vsyncadd [#allocation4], %s14
      %s16 = sshll.u32 [#allocation3], 4
      %s17 = int_to_ptr.vmem [resolvable:$true] %s16
      %22 = dma.hbm_to_vmem [thread:$0]  %s0, 256, %s17, [#allocation4], 128, 128, 8
    $region5: #{tpu_custom_call.1} parent=1 // pred_fallthru
      _
    // Predicated region
    $region6: #{tpu_custom_call.1} parent=1 // pred_check
      _
    $region7: #{tpu_custom_call.1} parent=1 // pred_check_branch
      %24 = sbr.rel (0) target = $region9
    $region8: #{tpu_custom_call.1} parent=1 // pred_region
      %s26 = ssub.s32 256, 256
      %27 = vsyncadd [#allocation7], %s26
      %s28 = sshll.u32 [#allocation6], 4
      %s29 = int_to_ptr.vmem [resolvable:$true] %s28
      %34 = dma.hbm_to_vmem [thread:$0]  %s1, 256, %s29, [#allocation7], 64, 64, 4
    $region9: #{tpu_custom_call.1} parent=1 // pred_fallthru
      _
    // Predicated region
    $region10: #{tpu_custom_call.1} parent=1 // pred_check
      _
    $region11: #{tpu_custom_call.1} parent=1 // pred_check_branch
      %36 = sbr.rel (0) target = $region13
    $region12: #{tpu_custom_call.1} parent=1 // pred_region
      _
    $region13: #{tpu_custom_call.1} parent=1 // pred_fallthru
      _
    // Predicated region
    $region14: #{tpu_custom_call.1} parent=1 // pred_check
      _
    $region15: #{tpu_custom_call.1} parent=1 // pred_check_branch
      %38 = sbr.rel (0) target = $region17
    $region16: #{tpu_custom_call.1} parent=1 // pred_region
      %39 = dma.done [#allocation4], 256
    $region17: #{tpu_custom_call.1} parent=1 // pred_fallthru
      _
    // Predicated region
    $region18: #{tpu_custom_call.1} parent=1 // pred_check
      _
    $region19: #{tpu_custom_call.1} parent=1 // pred_check_branch
      %41 = sbr.rel (0) target = $region21
    $region20: #{tpu_custom_call.1} parent=1 // pred_region
      %42 = dma.done [#allocation7], 256
    $region21: #{tpu_custom_call.1} parent=1 // pred_fallthru
      _
    %p44 = scmp.eq.s32.totalorder 0, 0
    // Predicated region
    $region22: #{tpu_custom_call.1} parent=1 // pred_check
      %p45 = pneg %p44
    $region23: #{tpu_custom_call.1} parent=1 // pred_check_branch
      %47 = sbr.rel (%p45) target = $region25
    $region24: #{tpu_custom_call.1} parent=1 // pred_region
      %vm48 = vcmask 261120
      %49 = vst.msk [vmem:[#allocation2] sm:$0xff] %vm48, 0.0
      %50 = vst.msk [vmem:[#allocation2 + $0x8] sm:$0xff] %vm48, 0.0
    $region25: #{tpu_custom_call.1} parent=1 // pred_fallthru
      _
    %v51 = vld [vmem:[#allocation2] sm:$0xff]
    %v52 = vld [vmem:[#allocation2 + $0x8] sm:$0xff]
    %v53 = vld [vmem:[#allocation3] sm:$0xff]
    %v54 = vld [vmem:[#allocation3 + $0x8] sm:$0xff]
    %v55 = vpack.c.bf16 %v54, %v53
    %v56 = vld [vmem:[#allocation6] sm:$0xf]
    %v57 = vld [vmem:[#allocation6 + $0x4] sm:$0xf]
    %v58 = vld [vmem:[#allocation6 + $0x8] sm:$0xf]
    %v59 = vld [vmem:[#allocation6 + $0xc] sm:$0xf]
    %v64 = vunpack.c.l.b16 %v56
    %v65 = vunpack.c.l.b16 %v57
    %v66 = vunpack.c.l.b16 %v58
    %v67 = vunpack.c.l.b16 %v59
    %v68 = vpack.c.b16 %v65, %v64
    %v69 = vpack.c.b16 %v67, %v66
    %vm72 = vcmask 261120
    %v74 = vsel %vm72, %v55, 0
    %76 = vmatprep.subr.bf16.mxu0 0
    %77 = vmatpush1.bf16.msra.mxu0 %v68
    %78 = vmatprep.subr.bf16.mxu0 0
    %79 = vmatpush1.bf16.msra.mxu0 %v69
    %80 = vmatprep.subr.bf16.mxu0 0
    %81 = vmatpush1.bf16.msra.mxu0 0
    %82 = vmatprep.subr.bf16.mxu0 0
    %83 = vmatpush1.bf16.msra.mxu0 0
    %84 = vmatprep.subr.bf16.mxu0 0
    %85 = vmatpush1.bf16.msra.mxu0 0
    %86 = vmatprep.subr.bf16.mxu0 0
    %87 = vmatpush1.bf16.msra.mxu0 0
    %88 = vmatprep.subr.bf16.mxu0 0
    %89 = vmatpush1.bf16.msra.mxu0 0
    %90 = vmatprep.subr.bf16.mxu0 0
    %91 = vmatpush1.bf16.msra.mxu0 0
    %92 = vmatprep.subr.bf16.mxu0 0
    %93 = vmatpush1.bf16.msra.mxu0 0
    %94 = vmatprep.subr.bf16.mxu0 0
    %95 = vmatpush1.bf16.msra.mxu0 0
    %96 = vmatprep.subr.bf16.mxu0 0
    %97 = vmatpush1.bf16.msra.mxu0 0
    %98 = vmatprep.subr.bf16.mxu0 0
    %99 = vmatpush1.bf16.msra.mxu0 0
    %100 = vmatprep.subr.bf16.mxu0 0
    %101 = vmatpush1.bf16.msra.mxu0 0
    %102 = vmatprep.subr.bf16.mxu0 0
    %103 = vmatpush1.bf16.msra.mxu0 0
    %104 = vmatprep.subr.bf16.mxu0 0
    %105 = vmatpush1.bf16.msra.mxu0 0
    %106 = vmatprep.subr.bf16.mxu0 0
    %107 = vmatpush1.bf16.msra.mxu0 0
    %108 = vmatprep.mubr.bf16.mxu0 0
    %109 = vmatmul.mubr.bf16.gmra.mrb[0].mxu0 %v74
    %v110 = vpop.f32.mrb[0].mxu0
    %v111 = vadd.f32 0.0, %v110
    %v112 = vpop.f32.mrb[0].mxu0
    %v113 = vpop.f32.mrb[0].mxu0
    %v114 = vadd.f32 0.0, %v113
    %v115 = vpop.f32.mrb[0].mxu0
    %116 = vdwg.mxu0
    %v117 = vadd.f32 %v51, %v111
    %v118 = vadd.f32 %v52, %v114
    %119 = vst.msk [vmem:[#allocation2] sm:$0xff] %vm72, %v117
    %120 = vst.msk [vmem:[#allocation2 + $0x8] sm:$0xff] %vm72, %v118
    // Predicated region
    $region26: #{tpu_custom_call.1} parent=1 // pred_check
      %p121 = pneg %p44
    $region27: #{tpu_custom_call.1} parent=1 // pred_check_branch
      %123 = sbr.rel (%p121) target = $region29
    $region28: #{tpu_custom_call.1} parent=1 // pred_region
      %v124 = vld [vmem:[#allocation2] sm:$0xff]
      %v125 = vld [vmem:[#allocation2 + $0x8] sm:$0xff]
      %v126 = vld [vmem:[%s2] sm:$0x1]
      %v128 = vlaneseq
      %v129 = vshrl.u32 %v128, 7
      %v130 = vsub.s32 0, %v129
      %v131 = vrot.slane %v126, %v130
      %v133 = vadd.f32 %v124, %v131
      %v134 = vadd.f32 %v125, %v131
      %135 = vst.msk [vmem:[#allocation8] sm:$0xff] %vm72, %v133
      %136 = vst.msk [vmem:[#allocation8 + $0x8] sm:$0xff] %vm72, %v134
    $region29: #{tpu_custom_call.1} parent=1 // pred_fallthru
      _
    // Predicated region
    $region30: #{tpu_custom_call.1} parent=1 // pred_check
      _
    $region31: #{tpu_custom_call.1} parent=1 // pred_check_branch
      %138 = sbr.rel (0) target = $region33
    $region32: #{tpu_custom_call.1} parent=1 // pred_region
      %s140 = ssub.s32 256, 256
      %141 = vsyncadd [#allocation5], %s140
      %s142 = sshll.u32 [#allocation8], 4
      %s143 = int_to_ptr.vmem [resolvable:$true] %s142
      %148 = dma.vmem_to_hbm [thread:$0]  %s143, 256, %s3, [#allocation5], 128, 128, 8
    $region33: #{tpu_custom_call.1} parent=1 // pred_fallthru
      _
    // Predicated region
    $region34: #{tpu_custom_call.1} parent=1 // pred_check
      _
    $region35: #{tpu_custom_call.1} parent=1 // pred_check_branch
      %150 = sbr.rel (0) target = $region37
    $region36: #{tpu_custom_call.1} parent=1 // pred_region
      %151 = dma.done [#allocation5], 256
    $region37: #{tpu_custom_call.1} parent=1 // pred_fallthru
      _
    %152 = vsyncpa [#allocation4], 1
    %153 = vsyncpa [#allocation7], 1
    %154 = vsyncpa [#allocation5], 1

</llo_original>
